<compile_context>
chip_gen: v5e
topology: v5e:2x2
jax: 0.10.0
libtpu: 0.0.40
codegen_flags: <defaults>
</compile_context>

<pallas_src>
import jax
import jax.numpy as jnp
from jax import lax
from jax.experimental import pallas as pl
from jax.experimental.pallas import tpu as pltpu

IN_DIM = 4
HIDDEN = 16
ACTIONS = 3


def self_aware_agent_kernel(x_ref, h0_ref, wih_ref, whh_ref, b_ref,
                            wheads_ref, bheads_ref,
                            probs_ref, hT_ref):
    """RNN recurrence + fused heads; everything VMEM/vreg resident, batch-major.

    x_ref      : [B*T, 4]  bf16, batch-major flattened input (row = b*T + t)
    h0_ref     : [B, H]    f32
    wih_ref    : [4, H]    bf16 (W_ih^T)       whh_ref : [H, H] bf16 (W_hh^T)
    b_ref      : [1, H]    f32  (b_ih + b_hh)
    wheads_ref : [H, 6]    bf16 concat(W_a^T | W_s^T)
    bheads_ref : [1, 6]    f32  concat(b_a | b_s)
    probs_ref  : [B*T, 6]  f32  merged (action_probs | self_pred)
    hT_ref     : [B, H]    f32  final hidden state
    """
    BT = x_ref.shape[0]
    B, H = h0_ref.shape
    T = BT // B

    # (1) Input projection hoisted off the serial chain: one batched bf16 MXU call,
    #     result kept as a vreg-resident f32 value (no scratch round trip).
    pre = (jnp.dot(x_ref[...], wih_ref[...], preferred_element_type=jnp.float32)
           + b_ref[...])                                   # [B*T, H]
    pre = pre.reshape(B, T, H)                             # layout-preserving split

    # (2) Loop-invariant recurrent weight loaded once; stays live in vregs.
    whh = whh_ref[...]                                     # [H, H] bf16

    # (3) Serial recurrence, statically unrolled; per-step hidden states collected as
    #     values (no VMEM stores inside the loop).
    h = h0_ref[...]                                        # f32 carried state
    hs = []
    for t in range(T):                                     # T small & static -> unroll
        h = jnp.tanh(pre[:, t, :]
                     + jnp.dot(h.astype(jnp.bfloat16), whh,
                               preferred_element_type=jnp.float32))
        hs.append(h)
    hT_ref[...] = h

    # (4) Heads hoisted out of the loop: ONE fused [B*T, H] @ [H, 6] matmul over all
    #     steps, batched softmaxes, single merged lane-packed store.
    hall = jnp.stack(hs, axis=1).reshape(BT, H)            # batch-major [B*T, H]
    logits = (jnp.dot(hall.astype(jnp.bfloat16), wheads_ref[...],
                      preferred_element_type=jnp.float32) + bheads_ref[...])

    def softmax(z):
        m = jnp.max(z, axis=-1, keepdims=True)
        e = jnp.exp(z - m)
        return e * pl.reciprocal(jnp.sum(e, axis=-1, keepdims=True), approx=False)

    probs_ref[...] = jnp.concatenate(
        [softmax(logits[:, :ACTIONS]), softmax(logits[:, ACTIONS:])], axis=-1)


def self_aware_agent_forward(state, prev_action, hidden, params):
    """Matches SelfAwareAgent.forward semantics (batch_first RNN, tanh, two softmax heads)."""
    x = jnp.concatenate([state, prev_action], axis=-1)                        # [B, T, 4]
    B, T, _ = x.shape
    H = params["w_hh"].shape[0]

    # Reshape-only glue (no transposes): batch-major flat slab, row = b*T + t.
    x_flat = x.reshape(B * T, IN_DIM).astype(jnp.bfloat16)
    h0 = hidden[0].astype(jnp.float32)                                        # [B, H]
    wih_t = params["w_ih"].T.astype(jnp.bfloat16)                             # [4, H]
    whh_t = params["w_hh"].T.astype(jnp.bfloat16)                             # [H, H]
    b = (params["b_ih"] + params["b_hh"]).reshape(1, H).astype(jnp.float32)
    w_heads = jnp.concatenate([params["w_a"].T, params["w_s"].T],
                              axis=1).astype(jnp.bfloat16)                    # [H, 6]
    b_heads = jnp.concatenate([params["b_a"], params["b_s"]]
                              ).reshape(1, 2 * ACTIONS).astype(jnp.float32)   # [1, 6]

    vmem = pl.BlockSpec(memory_space=pltpu.MemorySpace.VMEM)
    out_shapes = (
        jax.ShapeDtypeStruct((B * T, 2 * ACTIONS), jnp.float32),   # merged probabilities
        jax.ShapeDtypeStruct((B, H), jnp.float32),                 # final hidden
    )
    cost = pl.CostEstimate(
        flops=2 * B * T * (IN_DIM * H + H * H + H * 2 * ACTIONS),
        transcendentals=B * T * (H + 2 * ACTIONS + 2),
        bytes_accessed=(2 * (B * T * IN_DIM + IN_DIM * H + H * H + H * 2 * ACTIONS)
                        + 4 * (2 * B * H + H + 2 * ACTIONS + B * T * 2 * ACTIONS)),
    )

    probs, hT = pl.pallas_call(
        self_aware_agent_kernel,
        out_shape=out_shapes,
        in_specs=[vmem] * 7,
        out_specs=(vmem, vmem),
        cost_estimate=cost,
    )(x_flat, h0, wih_t, whh_t, b, w_heads, b_heads)

    probs = probs.reshape(B, T, 2 * ACTIONS)           # free reshape (batch-major kernel)
    action_probs = probs[..., :ACTIONS]                # [B, T, 3]
    self_pred = probs[..., ACTIONS:]                   # [B, T, 3]
    new_hidden = hT[None]                              # [1, B, H]
    return action_probs, self_pred, new_hidden


def reference_forward(state, prev_action, hidden, p):
    """Pure-JAX f32 reference (mirrors torch.nn.RNN with tanh + batch_first)."""
    x = jnp.concatenate([state, prev_action], axis=-1)

    def cell(h, x_t):
        h_new = jnp.tanh(x_t @ p["w_ih"].T + p["b_ih"] + h @ p["w_hh"].T + p["b_hh"])
        return h_new, h_new

    hT, outs = lax.scan(cell, hidden[0], jnp.transpose(x, (1, 0, 2)))
    outs = jnp.transpose(outs, (1, 0, 2))
    a = jax.nn.softmax(outs @ p["w_a"].T + p["b_a"], axis=-1)
    s = jax.nn.softmax(outs @ p["w_s"].T + p["b_s"], axis=-1)
    return a, s, hT[None]


def init_params(key):
    """Deterministic init following PyTorch's uniform(-1/sqrt(H), 1/sqrt(H))."""
    k = 1.0 / jnp.sqrt(jnp.float32(HIDDEN))
    keys = jax.random.split(key, 8)
    u = lambda kk, shape: jax.random.uniform(kk, shape, jnp.float32, -k, k)
    return {
        "w_ih": u(keys[0], (HIDDEN, IN_DIM)),
        "w_hh": u(keys[1], (HIDDEN, HIDDEN)),
        "b_ih": u(keys[2], (HIDDEN,)),
        "b_hh": u(keys[3], (HIDDEN,)),
        "w_a": u(keys[4], (ACTIONS, HIDDEN)),
        "b_a": u(keys[5], (ACTIONS,)),
        "w_s": u(keys[6], (ACTIONS, HIDDEN)),
        "b_s": u(keys[7], (ACTIONS,)),
    }


if __name__ == "__main__":
    key = jax.random.PRNGKey(0)
    k_param, k_state, k_act, k_hid = jax.random.split(key, 4)

    B, T = 2, 8
    params = init_params(k_param)
    state = jax.random.normal(k_state, (B, T, 1), jnp.float32)       # 1 state feat
    prev_action = jax.random.normal(k_act, (B, T, 3), jnp.float32)   # 3 action feats -> cat = 4
    hidden = jax.random.normal(k_hid, (1, B, HIDDEN), jnp.float32)   # [num_layers=1, B, H]

    action_probs, self_pred, new_hidden = jax.block_until_ready(
        self_aware_agent_forward(state, prev_action, hidden, params))

    a_ref, s_ref, h_ref = reference_forward(state, prev_action, hidden, params)
    assert action_probs.shape == (B, T, ACTIONS)
    assert self_pred.shape == (B, T, ACTIONS)
    assert new_hidden.shape == (1, B, HIDDEN)
    # Tolerance reflects bf16 MXU operands (f32 accumulation, f32 tanh/softmax).
    assert jnp.allclose(action_probs, a_ref, atol=1e-2, rtol=1e-2)
    assert jnp.allclose(self_pred, s_ref, atol=1e-2, rtol=1e-2)
    assert jnp.allclose(new_hidden, h_ref, atol=1e-2, rtol=1e-2)

    print("KERNEL_OK")
</pallas_src>

<mosaic_0001>
module attributes {stable_mosaic.version = 11 : i64} {
  func.func @self_aware_agent_kernel(%arg0: memref<16x4xbf16, #tpu.memory_space<vmem>>, %arg1: memref<2x16xf32, #tpu.memory_space<vmem>>, %arg2: memref<4x16xbf16, #tpu.memory_space<vmem>>, %arg3: memref<16x16xbf16, #tpu.memory_space<vmem>>, %arg4: memref<1x16xf32, #tpu.memory_space<vmem>>, %arg5: memref<16x6xbf16, #tpu.memory_space<vmem>>, %arg6: memref<1x6xf32, #tpu.memory_space<vmem>>, %arg7: memref<16x6xf32, #tpu.memory_space<vmem>>, %arg8: memref<2x16xf32, #tpu.memory_space<vmem>>) attributes {dimension_semantics = [], scalar_prefetch = 0 : i64, scratch_operands = 0 : i64, tpu.core_type = #tpu.core_type<tc>} {
    %c0 = arith.constant 0 : index
    %c0_0 = arith.constant 0 : index
    %0 = vector.load %arg0[%c0, %c0_0] : memref<16x4xbf16, #tpu.memory_space<vmem>>, vector<16x4xbf16>
    %c0_1 = arith.constant 0 : index
    %c0_2 = arith.constant 0 : index
    %1 = vector.load %arg2[%c0_1, %c0_2] : memref<4x16xbf16, #tpu.memory_space<vmem>>, vector<4x16xbf16>
    %cst = arith.constant dense<0.000000e+00> : vector<16x16xf32>
    %2 = tpu.matmul %0, %1, %cst {dimension_numbers = #tpu.dot_dimension_numbers<[1], [0], [0], [1], [0, 0, 1, 1], [], []>} : vector<16x4xbf16>, vector<4x16xbf16>, vector<16x16xf32> -> vector<16x16xf32>
    %c0_3 = arith.constant 0 : index
    %c0_4 = arith.constant 0 : index
    %3 = vector.load %arg4[%c0_3, %c0_4] : memref<1x16xf32, #tpu.memory_space<vmem>>, vector<1x16xf32>
    %4 = vector.broadcast %3 : vector<1x16xf32> to vector<16x16xf32>
    %5 = arith.addf %2, %4 : vector<16x16xf32>
    %6 = vector.shape_cast %5 : vector<16x16xf32> to vector<2x8x16xf32>
    %c0_5 = arith.constant 0 : index
    %c0_6 = arith.constant 0 : index
    %7 = vector.load %arg3[%c0_5, %c0_6] : memref<16x16xbf16, #tpu.memory_space<vmem>>, vector<16x16xbf16>
    %c0_7 = arith.constant 0 : index
    %c0_8 = arith.constant 0 : index
    %8 = vector.load %arg1[%c0_7, %c0_8] : memref<2x16xf32, #tpu.memory_space<vmem>>, vector<2x16xf32>
    %9 = vector.extract_strided_slice %6 {offsets = [0, 0, 0], sizes = [2, 1, 16], strides = [1, 1, 1]} : vector<2x8x16xf32> to vector<2x1x16xf32>
    %10 = vector.shape_cast %9 : vector<2x1x16xf32> to vector<2x16xf32>
    %11 = arith.truncf %8 : vector<2x16xf32> to vector<2x16xbf16>
    %cst_9 = arith.constant dense<0.000000e+00> : vector<2x16xf32>
    %12 = tpu.matmul %11, %7, %cst_9 {dimension_numbers = #tpu.dot_dimension_numbers<[1], [0], [0], [1], [0, 0, 1, 1], [], []>} : vector<2x16xbf16>, vector<16x16xbf16>, vector<2x16xf32> -> vector<2x16xf32>
    %13 = arith.addf %10, %12 : vector<2x16xf32>
    %14 = math.tanh %13 : vector<2x16xf32>
    %15 = vector.extract_strided_slice %6 {offsets = [0, 1, 0], sizes = [2, 1, 16], strides = [1, 1, 1]} : vector<2x8x16xf32> to vector<2x1x16xf32>
    %16 = vector.shape_cast %15 : vector<2x1x16xf32> to vector<2x16xf32>
    %17 = arith.truncf %14 : vector<2x16xf32> to vector<2x16xbf16>
    %cst_10 = arith.constant dense<0.000000e+00> : vector<2x16xf32>
    %18 = tpu.matmul %17, %7, %cst_10 {dimension_numbers = #tpu.dot_dimension_numbers<[1], [0], [0], [1], [0, 0, 1, 1], [], []>} : vector<2x16xbf16>, vector<16x16xbf16>, vector<2x16xf32> -> vector<2x16xf32>
    %19 = arith.addf %16, %18 : vector<2x16xf32>
    %20 = math.tanh %19 : vector<2x16xf32>
    %21 = vector.extract_strided_slice %6 {offsets = [0, 2, 0], sizes = [2, 1, 16], strides = [1, 1, 1]} : vector<2x8x16xf32> to vector<2x1x16xf32>
    %22 = vector.shape_cast %21 : vector<2x1x16xf32> to vector<2x16xf32>
    %23 = arith.truncf %20 : vector<2x16xf32> to vector<2x16xbf16>
    %cst_11 = arith.constant dense<0.000000e+00> : vector<2x16xf32>
    %24 = tpu.matmul %23, %7, %cst_11 {dimension_numbers = #tpu.dot_dimension_numbers<[1], [0], [0], [1], [0, 0, 1, 1], [], []>} : vector<2x16xbf16>, vector<16x16xbf16>, vector<2x16xf32> -> vector<2x16xf32>
    %25 = arith.addf %22, %24 : vector<2x16xf32>
    %26 = math.tanh %25 : vector<2x16xf32>
    %27 = vector.extract_strided_slice %6 {offsets = [0, 3, 0], sizes = [2, 1, 16], strides = [1, 1, 1]} : vector<2x8x16xf32> to vector<2x1x16xf32>
    %28 = vector.shape_cast %27 : vector<2x1x16xf32> to vector<2x16xf32>
    %29 = arith.truncf %26 : vector<2x16xf32> to vector<2x16xbf16>
    %cst_12 = arith.constant dense<0.000000e+00> : vector<2x16xf32>
    %30 = tpu.matmul %29, %7, %cst_12 {dimension_numbers = #tpu.dot_dimension_numbers<[1], [0], [0], [1], [0, 0, 1, 1], [], []>} : vector<2x16xbf16>, vector<16x16xbf16>, vector<2x16xf32> -> vector<2x16xf32>
    %31 = arith.addf %28, %30 : vector<2x16xf32>
    %32 = math.tanh %31 : vector<2x16xf32>
    %33 = vector.extract_strided_slice %6 {offsets = [0, 4, 0], sizes = [2, 1, 16], strides = [1, 1, 1]} : vector<2x8x16xf32> to vector<2x1x16xf32>
    %34 = vector.shape_cast %33 : vector<2x1x16xf32> to vector<2x16xf32>
    %35 = arith.truncf %32 : vector<2x16xf32> to vector<2x16xbf16>
    %cst_13 = arith.constant dense<0.000000e+00> : vector<2x16xf32>
    %36 = tpu.matmul %35, %7, %cst_13 {dimension_numbers = #tpu.dot_dimension_numbers<[1], [0], [0], [1], [0, 0, 1, 1], [], []>} : vector<2x16xbf16>, vector<16x16xbf16>, vector<2x16xf32> -> vector<2x16xf32>
    %37 = arith.addf %34, %36 : vector<2x16xf32>
    %38 = math.tanh %37 : vector<2x16xf32>
    %39 = vector.extract_strided_slice %6 {offsets = [0, 5, 0], sizes = [2, 1, 16], strides = [1, 1, 1]} : vector<2x8x16xf32> to vector<2x1x16xf32>
    %40 = vector.shape_cast %39 : vector<2x1x16xf32> to vector<2x16xf32>
    %41 = arith.truncf %38 : vector<2x16xf32> to vector<2x16xbf16>
    %cst_14 = arith.constant dense<0.000000e+00> : vector<2x16xf32>
    %42 = tpu.matmul %41, %7, %cst_14 {dimension_numbers = #tpu.dot_dimension_numbers<[1], [0], [0], [1], [0, 0, 1, 1], [], []>} : vector<2x16xbf16>, vector<16x16xbf16>, vector<2x16xf32> -> vector<2x16xf32>
    %43 = arith.addf %40, %42 : vector<2x16xf32>
    %44 = math.tanh %43 : vector<2x16xf32>
    %45 = vector.extract_strided_slice %6 {offsets = [0, 6, 0], sizes = [2, 1, 16], strides = [1, 1, 1]} : vector<2x8x16xf32> to vector<2x1x16xf32>
    %46 = vector.shape_cast %45 : vector<2x1x16xf32> to vector<2x16xf32>
    %47 = arith.truncf %44 : vector<2x16xf32> to vector<2x16xbf16>
    %cst_15 = arith.constant dense<0.000000e+00> : vector<2x16xf32>
    %48 = tpu.matmul %47, %7, %cst_15 {dimension_numbers = #tpu.dot_dimension_numbers<[1], [0], [0], [1], [0, 0, 1, 1], [], []>} : vector<2x16xbf16>, vector<16x16xbf16>, vector<2x16xf32> -> vector<2x16xf32>
    %49 = arith.addf %46, %48 : vector<2x16xf32>
    %50 = math.tanh %49 : vector<2x16xf32>
    %51 = vector.extract_strided_slice %6 {offsets = [0, 7, 0], sizes = [2, 1, 16], strides = [1, 1, 1]} : vector<2x8x16xf32> to vector<2x1x16xf32>
    %52 = vector.shape_cast %51 : vector<2x1x16xf32> to vector<2x16xf32>
    %53 = arith.truncf %50 : vector<2x16xf32> to vector<2x16xbf16>
    %cst_16 = arith.constant dense<0.000000e+00> : vector<2x16xf32>
    %54 = tpu.matmul %53, %7, %cst_16 {dimension_numbers = #tpu.dot_dimension_numbers<[1], [0], [0], [1], [0, 0, 1, 1], [], []>} : vector<2x16xbf16>, vector<16x16xbf16>, vector<2x16xf32> -> vector<2x16xf32>
    %55 = arith.addf %52, %54 : vector<2x16xf32>
    %56 = math.tanh %55 : vector<2x16xf32>
    %c0_17 = arith.constant 0 : index
    %c0_18 = arith.constant 0 : index
    %57 = vector.load %arg8[%c0_17, %c0_18] : memref<2x16xf32, #tpu.memory_space<vmem>>, vector<2x16xf32>
    tpu.vector_store %arg8[%c0_17, %c0_18], %56 {strides = array<i32>} : memref<2x16xf32, #tpu.memory_space<vmem>>, vector<2x16xf32>,
    %58 = vector.shape_cast %14 : vector<2x16xf32> to vector<2x1x16xf32>
    %59 = vector.shape_cast %20 : vector<2x16xf32> to vector<2x1x16xf32>
    %60 = vector.shape_cast %26 : vector<2x16xf32> to vector<2x1x16xf32>
    %61 = vector.shape_cast %32 : vector<2x16xf32> to vector<2x1x16xf32>
    %62 = vector.shape_cast %38 : vector<2x16xf32> to vector<2x1x16xf32>
    %63 = vector.shape_cast %44 : vector<2x16xf32> to vector<2x1x16xf32>
    %64 = vector.shape_cast %50 : vector<2x16xf32> to vector<2x1x16xf32>
    %65 = vector.shape_cast %56 : vector<2x16xf32> to vector<2x1x16xf32>
    %66 = tpu.concatenate %58, %59, %60, %61, %62, %63, %64, %65 in 1 : vector<2x1x16xf32>, vector<2x1x16xf32>, vector<2x1x16xf32>, vector<2x1x16xf32>, vector<2x1x16xf32>, vector<2x1x16xf32>, vector<2x1x16xf32>, vector<2x1x16xf32> -> vector<2x8x16xf32>
    %67 = vector.shape_cast %66 : vector<2x8x16xf32> to vector<16x16xf32>
    %68 = arith.truncf %67 : vector<16x16xf32> to vector<16x16xbf16>
    %c0_19 = arith.constant 0 : index
    %c0_20 = arith.constant 0 : index
    %69 = vector.load %arg5[%c0_19, %c0_20] : memref<16x6xbf16, #tpu.memory_space<vmem>>, vector<16x6xbf16>
    %cst_21 = arith.constant dense<0.000000e+00> : vector<16x6xf32>
    %70 = tpu.matmul %68, %69, %cst_21 {dimension_numbers = #tpu.dot_dimension_numbers<[1], [0], [0], [1], [0, 0, 1, 1], [], []>} : vector<16x16xbf16>, vector<16x6xbf16>, vector<16x6xf32> -> vector<16x6xf32>
    %c0_22 = arith.constant 0 : index
    %c0_23 = arith.constant 0 : index
    %71 = vector.load %arg6[%c0_22, %c0_23] : memref<1x6xf32, #tpu.memory_space<vmem>>, vector<1x6xf32>
    %72 = vector.broadcast %71 : vector<1x6xf32> to vector<16x6xf32>
    %73 = arith.addf %70, %72 : vector<16x6xf32>
    %74 = vector.extract_strided_slice %73 {offsets = [0, 0], sizes = [16, 3], strides = [1, 1]} : vector<16x6xf32> to vector<16x3xf32>
    %cst_24 = arith.constant dense<0xFF800000> : vector<16xf32>
    %75 = vector.multi_reduction <maximumf>, %74, %cst_24 [1] : vector<16x3xf32> to vector<16xf32>
    %76 = vector.shape_cast %75 : vector<16xf32> to vector<16x1xf32>
    %77 = vector.broadcast %76 : vector<16x1xf32> to vector<16x3xf32>
    %78 = arith.subf %74, %77 : vector<16x3xf32>
    %79 = math.exp %78 : vector<16x3xf32>
    %cst_25 = arith.constant dense<0.000000e+00> : vector<16xf32>
    %80 = vector.multi_reduction <add>, %79, %cst_25 [1] : vector<16x3xf32> to vector<16xf32>
    %81 = vector.shape_cast %80 : vector<16xf32> to vector<16x1xf32>
    %82 = tpu.reciprocal %81 : vector<16x1xf32> -> vector<16x1xf32>
    %83 = vector.broadcast %82 : vector<16x1xf32> to vector<16x3xf32>
    %84 = arith.mulf %79, %83 : vector<16x3xf32>
    %85 = vector.extract_strided_slice %73 {offsets = [0, 3], sizes = [16, 3], strides = [1, 1]} : vector<16x6xf32> to vector<16x3xf32>
    %cst_26 = arith.constant dense<0xFF800000> : vector<16xf32>
    %86 = vector.multi_reduction <maximumf>, %85, %cst_26 [1] : vector<16x3xf32> to vector<16xf32>
    %87 = vector.shape_cast %86 : vector<16xf32> to vector<16x1xf32>
    %88 = vector.broadcast %87 : vector<16x1xf32> to vector<16x3xf32>
    %89 = arith.subf %85, %88 : vector<16x3xf32>
    %90 = math.exp %89 : vector<16x3xf32>
    %cst_27 = arith.constant dense<0.000000e+00> : vector<16xf32>
    %91 = vector.multi_reduction <add>, %90, %cst_27 [1] : vector<16x3xf32> to vector<16xf32>
    %92 = vector.shape_cast %91 : vector<16xf32> to vector<16x1xf32>
    %93 = tpu.reciprocal %92 : vector<16x1xf32> -> vector<16x1xf32>
    %94 = vector.broadcast %93 : vector<16x1xf32> to vector<16x3xf32>
    %95 = arith.mulf %90, %94 : vector<16x3xf32>
    %96 = tpu.concatenate %84, %95 in 1 : vector<16x3xf32>, vector<16x3xf32> -> vector<16x6xf32>
    %c0_28 = arith.constant 0 : index
    %c0_29 = arith.constant 0 : index
    %97 = vector.load %arg7[%c0_28, %c0_29] : memref<16x6xf32, #tpu.memory_space<vmem>>, vector<16x6xf32>
    tpu.vector_store %arg7[%c0_28, %c0_29], %96 {strides = array<i32>} : memref<16x6xf32, #tpu.memory_space<vmem>>, vector<16x6xf32>,
    return
  }
}

</mosaic_0001>

<llo_original>
// kernel: tpu_custom_call.1
$region0: #{tpu_custom_call.1}
  #allocation0 [shape = 'u32[]', space=smem, size = 0x4, offset = 0x4, fixed_abs, tag = 'smem constant byte address 0x4 - core index']
  #allocation1 [shape = 'u32[72,128]{1,0:T(1,128)}', space=vmem, size = 0x9000, scoped, tag = 'internal scratch']
  %s0 = inlined_call_operand.vmem [shape: bf16[16,4], index: 0, kind: input, shape index: {}]
  %s1 = inlined_call_operand.vmem [shape: f32[2,16], index: 1, kind: input, shape index: {}]
  %s2 = inlined_call_operand.vmem [shape: bf16[4,16], index: 2, kind: input, shape index: {}]
  %s3 = inlined_call_operand.vmem [shape: bf16[16,16], index: 3, kind: input, shape index: {}]
  %s4 = inlined_call_operand.vmem [shape: f32[1,16], index: 4, kind: input, shape index: {}]
  %s5 = inlined_call_operand.vmem [shape: bf16[16,6], index: 5, kind: input, shape index: {}]
  %s6 = inlined_call_operand.vmem [shape: f32[1,6], index: 6, kind: input, shape index: {}]
  %s7 = inlined_call_operand.vmem [shape: f32[16,6], index: 7, kind: output, shape index: {0}]
  %s8 = inlined_call_operand.hbm [shape: f32[2,16], index: 8, kind: output, shape index: {1}]
  %9 = xla_tuple %s7, %s8
  %s10 = sld [smem:[#allocation0]]
  $region46: #{tpu_custom_call.1} parent=0
    _
  %s12 = ssub.s32 1, %s10
  %s13 = scalar_select 0, %s12, %s10
  $region1: #{tpu_custom_call.1} parent=0
    #allocation2 [shape = 'u8[1024]{0}', space=vmem, size = 0x400, scoped, tag = 'output window, operand 1, single buffered']
    #allocation3 [shape = 's32[1]{0}', space=sflag, size = 0x4, scoped, tag = 'scoped memory for tpu_custom_call.1']
    %14 = vsyncpa [#allocation3], 0
    // Predicated region
    $region2: #{tpu_custom_call.1} parent=1 // pred_check
      _
    $region3: #{tpu_custom_call.1} parent=1 // pred_check_branch
      %16 = sbr.rel (0) target = $region5
    $region4: #{tpu_custom_call.1} parent=1 // pred_region
      _
    $region5: #{tpu_custom_call.1} parent=1 // pred_fallthru
      _
    // Predicated region
    $region6: #{tpu_custom_call.1} parent=1 // pred_check
      _
    $region7: #{tpu_custom_call.1} parent=1 // pred_check_branch
      %18 = sbr.rel (0) target = $region9
    $region8: #{tpu_custom_call.1} parent=1 // pred_region
      _
    $region9: #{tpu_custom_call.1} parent=1 // pred_fallthru
      _
    // Predicated region
    $region10: #{tpu_custom_call.1} parent=1 // pred_check
      _
    $region11: #{tpu_custom_call.1} parent=1 // pred_check_branch
      %20 = sbr.rel (0) target = $region13
    $region12: #{tpu_custom_call.1} parent=1 // pred_region
      _
    $region13: #{tpu_custom_call.1} parent=1 // pred_fallthru
      _
    // Predicated region
    $region14: #{tpu_custom_call.1} parent=1 // pred_check
      _
    $region15: #{tpu_custom_call.1} parent=1 // pred_check_branch
      %22 = sbr.rel (0) target = $region17
    $region16: #{tpu_custom_call.1} parent=1 // pred_region
      _
    $region17: #{tpu_custom_call.1} parent=1 // pred_fallthru
      _
    // Predicated region
    $region18: #{tpu_custom_call.1} parent=1 // pred_check
      _
    $region19: #{tpu_custom_call.1} parent=1 // pred_check_branch
      %24 = sbr.rel (0) target = $region21
    $region20: #{tpu_custom_call.1} parent=1 // pred_region
      _
    $region21: #{tpu_custom_call.1} parent=1 // pred_fallthru
      _
    // Predicated region
    $region22: #{tpu_custom_call.1} parent=1 // pred_check
      _
    $region23: #{tpu_custom_call.1} parent=1 // pred_check_branch
      %26 = sbr.rel (0) target = $region25
    $region24: #{tpu_custom_call.1} parent=1 // pred_region
      _
    $region25: #{tpu_custom_call.1} parent=1 // pred_fallthru
      _
    // Predicated region
    $region26: #{tpu_custom_call.1} parent=1 // pred_check
      _
    $region27: #{tpu_custom_call.1} parent=1 // pred_check_branch
      %28 = sbr.rel (0) target = $region29
    $region28: #{tpu_custom_call.1} parent=1 // pred_region
      _
    $region29: #{tpu_custom_call.1} parent=1 // pred_fallthru
      _
    %v30 = vld [vmem:[%s0] sm:$0xf]
    %v31 = vld [vmem:[%s0 + $0x4] sm:$0xf]
    %v32 = vld [vmem:[%s2] sm:$0x3]
    %v33 = vld [vmem:[%s4] sm:$0x1]
    %v35 = vperm.slane %v33, 0
    %v39 = vunpack.c.l.b16 %v30
    %v40 = vunpack.c.l.b16 %v31
    %v41 = vpack.c.b16 %v40, %v39
    %vm42 = vcmask 31744
    %v44 = vsel %vm42, %v41, 0
    %vm46 = vcmask 1041408
    %v48 = vsel %vm46, %v32, 0
    %50 = vmatpush.bf16.msra.mxu0 0
    %51 = vmatpush.bf16.msra.mxu0 0
    %52 = vmatpush.bf16.msra.mxu0 0
    %53 = vmatpush.bf16.msra.mxu0 0
    %54 = vmatpush.bf16.msra.mxu0 0
    %55 = vmatpush.bf16.msra.mxu0 0
    %56 = vmatpush.bf16.msra.mxu0 0
    %57 = vmatpush.bf16.msra.mxu0 %v48
    %58 = vmatmul.bf16.gmra.mxu0 %v44
    %v59 = vpop.f32.mrf.mxu0
    %v60 = vadd.f32 %v35, %v59
    %v61 = vpop.f32.mrf.mxu0
    %v62 = vadd.f32 %v35, %v61
    %63 = vdwg.mxu0
    %v64 = vld [vmem:[%s3] sm:$0xf]
    %v65 = vld [vmem:[%s3 + $0x4] sm:$0xf]
    %v66 = vld [vmem:[%s1] sm:$0x3]
    %v67 = vpack.c.bf16 %v66, %v66
    %v70 = vunpack.c.l.b16 %v64
    %v71 = vunpack.c.l.b16 %v65
    %v72 = vpack.c.b16 %v71, %v70
    %vm74 = vcmask 130048
    %v76 = vsel %vm74, %v67, 0
    %78 = vmatpush.bf16.msra.mxu0 0
    %79 = vmatpush.bf16.msra.mxu0 0
    %80 = vmatpush.bf16.msra.mxu0 0
    %81 = vmatpush.bf16.msra.mxu0 0
    %82 = vmatpush.bf16.msra.mxu0 0
    %83 = vmatpush.bf16.msra.mxu0 0
    %84 = vmatpush.bf16.msra.mxu0 0
    %85 = vmatpush.bf16.msra.mxu0 %v72
    %86 = vmatmul.bf16.gmra.mxu0 %v76
    %v87 = vpop.f32.mrf.mxu0
    %v88 = vadd.f32 0.0, %v87
    %v89 = vpop.f32.mrf.mxu0
    %90 = vdwg.mxu0
    %v92 = vrot.slane %v88, 1
    %v95 = vadd.f32 %v60, %v88
    %v96 = vadd.f32 %v62, %v92
    %v97 = vtanh.pop %v95
    %v98 = vtanh.pop %v96
    %v99 = vpack.c.bf16 %v97, %v97
    %v100 = vpack.c.bf16 %v98, %v98
    %v103 = vunpack.c.l.b16 %v99
    %v104 = vunpack.c.l.b16 %v100
    %v105 = vrot.slane %v104, 7
    %vm106 = vcmask 1041409
    %v107 = vsel %vm106, %v105, %v103
    %v108 = vpack.c.b16 %v107, %v107
    %v110 = vsel %vm74, %v108, 0
    %112 = vmatpush.bf16.msra.mxu0 0
    %113 = vmatpush.bf16.msra.mxu0 0
    %114 = vmatpush.bf16.msra.mxu0 0
    %115 = vmatpush.bf16.msra.mxu0 0
    %116 = vmatpush.bf16.msra.mxu0 0
    %117 = vmatpush.bf16.msra.mxu0 0
    %118 = vmatpush.bf16.msra.mxu0 0
    %119 = vmatpush.bf16.msra.mxu0 %v72
    %120 = vmatmul.bf16.gmra.mxu0 %v110
    %v121 = vpop.f32.mrf.mxu0
    %v122 = vadd.f32 0.0, %v121
    %v123 = vpop.f32.mrf.mxu0
    %124 = vdwg.mxu0
    %v126 = vrot.slane %v122, 7
    %v129 = vadd.f32 %v60, %v126
    %v130 = vadd.f32 %v62, %v122
    %v131 = vtanh.pop %v129
    %v132 = vtanh.pop %v130
    %v133 = vpack.c.bf16 %v131, %v131
    %v134 = vpack.c.bf16 %v132, %v132
    %v137 = vunpack.c.l.b16 %v133
    %v138 = vunpack.c.l.b16 %v134
    %v139 = vrot.slane %v137, 1
    %v140 = vsel %vm106, %v138, %v139
    %v141 = vpack.c.b16 %v140, %v140
    %v143 = vsel %vm74, %v141, 0
    %145 = vmatpush.bf16.msra.mxu0 0
    %146 = vmatpush.bf16.msra.mxu0 0
    %147 = vmatpush.bf16.msra.mxu0 0
    %148 = vmatpush.bf16.msra.mxu0 0
    %149 = vmatpush.bf16.msra.mxu0 0
    %150 = vmatpush.bf16.msra.mxu0 0
    %151 = vmatpush.bf16.msra.mxu0 0
    %152 = vmatpush.bf16.msra.mxu0 %v72
    %153 = vmatmul.bf16.gmra.mxu0 %v143
    %v154 = vpop.f32.mrf.mxu0
    %v155 = vadd.f32 0.0, %v154
    %v156 = vpop.f32.mrf.mxu0
    %157 = vdwg.mxu0
    %v159 = vrot.slane %v155, 6
    %v160 = vrot.slane %v155, 7
    %v163 = vadd.f32 %v60, %v159
    %v164 = vadd.f32 %v62, %v160
    %v165 = vtanh.pop %v163
    %v166 = vtanh.pop %v164
    %v167 = vpack.c.bf16 %v165, %v165
    %v168 = vpack.c.bf16 %v166, %v166
    %v171 = vunpack.c.l.b16 %v167
    %v172 = vunpack.c.l.b16 %v168
    %v173 = vrot.slane %v171, 2
    %v174 = vrot.slane %v172, 1
    %v175 = vsel %vm106, %v174, %v173
    %v176 = vpack.c.b16 %v175, %v175
    %v178 = vsel %vm74, %v176, 0
    %180 = vmatpush.bf16.msra.mxu0 0
    %181 = vmatpush.bf16.msra.mxu0 0
    %182 = vmatpush.bf16.msra.mxu0 0
    %183 = vmatpush.bf16.msra.mxu0 0
    %184 = vmatpush.bf16.msra.mxu0 0
    %185 = vmatpush.bf16.msra.mxu0 0
    %186 = vmatpush.bf16.msra.mxu0 0
    %187 = vmatpush.bf16.msra.mxu0 %v72
    %188 = vmatmul.bf16.gmra.mxu0 %v178
    %v189 = vpop.f32.mrf.mxu0
    %v190 = vadd.f32 0.0, %v189
    %v191 = vpop.f32.mrf.mxu0
    %192 = vdwg.mxu0
    %v194 = vrot.slane %v190, 5
    %v195 = vrot.slane %v190, 6
    %v198 = vadd.f32 %v60, %v194
    %v199 = vadd.f32 %v62, %v195
    %v200 = vtanh.pop %v198
    %v201 = vtanh.pop %v199
    %v202 = vpack.c.bf16 %v200, %v200
    %v203 = vpack.c.bf16 %v201, %v201
    %v206 = vunpack.c.l.b16 %v202
    %v207 = vunpack.c.l.b16 %v203
    %v208 = vrot.slane %v206, 3
    %v209 = vrot.slane %v207, 2
    %v210 = vsel %vm106, %v209, %v208
    %v211 = vpack.c.b16 %v210, %v210
    %v213 = vsel %vm74, %v211, 0
    %215 = vmatpush.bf16.msra.mxu0 0
    %216 = vmatpush.bf16.msra.mxu0 0
    %217 = vmatpush.bf16.msra.mxu0 0
    %218 = vmatpush.bf16.msra.mxu0 0
    %219 = vmatpush.bf16.msra.mxu0 0
    %220 = vmatpush.bf16.msra.mxu0 0
    %221 = vmatpush.bf16.msra.mxu0 0
    %222 = vmatpush.bf16.msra.mxu0 %v72
    %223 = vmatmul.bf16.gmra.mxu0 %v213
    %v224 = vpop.f32.mrf.mxu0
    %v225 = vadd.f32 0.0, %v224
    %v226 = vpop.f32.mrf.mxu0
    %227 = vdwg.mxu0
    %v229 = vrot.slane %v225, 4
    %v230 = vrot.slane %v225, 5
    %v233 = vadd.f32 %v60, %v229
    %v234 = vadd.f32 %v62, %v230
    %v235 = vtanh.pop %v233
    %v236 = vtanh.pop %v234
    %v237 = vpack.c.bf16 %v235, %v235
    %v238 = vpack.c.bf16 %v236, %v236
    %v241 = vunpack.c.l.b16 %v237
    %v242 = vunpack.c.l.b16 %v238
    %v243 = vrot.slane %v241, 4
    %v244 = vrot.slane %v242, 3
    %v245 = vsel %vm106, %v244, %v243
    %v246 = vpack.c.b16 %v245, %v245
    %v248 = vsel %vm74, %v246, 0
    %250 = vmatpush.bf16.msra.mxu0 0
    %251 = vmatpush.bf16.msra.mxu0 0
    %252 = vmatpush.bf16.msra.mxu0 0
    %253 = vmatpush.bf16.msra.mxu0 0
    %254 = vmatpush.bf16.msra.mxu0 0
    %255 = vmatpush.bf16.msra.mxu0 0
    %256 = vmatpush.bf16.msra.mxu0 0
    %257 = vmatpush.bf16.msra.mxu0 %v72
    %258 = vmatmul.bf16.gmra.mxu0 %v248
    %v259 = vpop.f32.mrf.mxu0
    %v260 = vadd.f32 0.0, %v259
    %v261 = vpop.f32.mrf.mxu0
    %262 = vdwg.mxu0
    %v264 = vrot.slane %v260, 3
    %v265 = vrot.slane %v260, 4
    %v268 = vadd.f32 %v60, %v264
    %v269 = vadd.f32 %v62, %v265
    %v270 = vtanh.pop %v268
    %v271 = vtanh.pop %v269
    %v272 = vpack.c.bf16 %v270, %v270
    %v273 = vpack.c.bf16 %v271, %v271
    %v276 = vunpack.c.l.b16 %v272
    %v277 = vunpack.c.l.b16 %v273
    %v278 = vrot.slane %v276, 5
    %v279 = vrot.slane %v277, 4
    %v280 = vsel %vm106, %v279, %v278
    %v281 = vpack.c.b16 %v280, %v280
    %v283 = vsel %vm74, %v281, 0
    %285 = vmatpush.bf16.msra.mxu0 0
    %286 = vmatpush.bf16.msra.mxu0 0
    %287 = vmatpush.bf16.msra.mxu0 0
    %288 = vmatpush.bf16.msra.mxu0 0
    %289 = vmatpush.bf16.msra.mxu0 0
    %290 = vmatpush.bf16.msra.mxu0 0
    %291 = vmatpush.bf16.msra.mxu0 0
    %292 = vmatpush.bf16.msra.mxu0 %v72
    %293 = vmatmul.bf16.gmra.mxu0 %v283
    %v294 = vpop.f32.mrf.mxu0
    %v295 = vadd.f32 0.0, %v294
    %v296 = vpop.f32.mrf.mxu0
    %297 = vdwg.mxu0
    %v299 = vrot.slane %v295, 2
    %v300 = vrot.slane %v295, 3
    %v303 = vadd.f32 %v60, %v299
    %v304 = vadd.f32 %v62, %v300
    %v305 = vtanh.pop %v303
    %v306 = vtanh.pop %v304
    %v307 = vpack.c.bf16 %v305, %v305
    %v308 = vpack.c.bf16 %v306, %v306
    %v311 = vunpack.c.l.b16 %v307
    %v312 = vunpack.c.l.b16 %v308
    %v313 = vrot.slane %v311, 6
    %v314 = vrot.slane %v312, 5
    %v315 = vsel %vm106, %v314, %v313
    %v316 = vpack.c.b16 %v315, %v315
    %v318 = vsel %vm74, %v316, 0
    %320 = vmatpush.bf16.msra.mxu0 0
    %321 = vmatpush.bf16.msra.mxu0 0
    %322 = vmatpush.bf16.msra.mxu0 0
    %323 = vmatpush.bf16.msra.mxu0 0
    %324 = vmatpush.bf16.msra.mxu0 0
    %325 = vmatpush.bf16.msra.mxu0 0
    %326 = vmatpush.bf16.msra.mxu0 0
    %327 = vmatpush.bf16.msra.mxu0 %v72
    %328 = vmatmul.bf16.gmra.mxu0 %v318
    %v329 = vpop.f32.mrf.mxu0
    %v330 = vadd.f32 0.0, %v329
    %v331 = vpop.f32.mrf.mxu0
    %332 = vdwg.mxu0
    %v334 = vrot.slane %v330, 1
    %v335 = vrot.slane %v330, 2
    %v338 = vadd.f32 %v60, %v334
    %v339 = vadd.f32 %v62, %v335
    %v340 = vtanh.pop %v338
    %v341 = vtanh.pop %v339
    %v344 = vrot.slane %v341, 7
    %vm347 = vcmask 130055
    %348 = vst.msk [vmem:[#allocation2 - $0x7] sm:$0x80] %vm347, %v340
    %vm349 = vcmask 122880
    %350 = vst.msk [vmem:[#allocation2 + $0x1] sm:$0x1] %vm349, %v344
    %vm351 = vcmask 1040384
    %v352 = vsel %vm351, %v97, %v131
    %v353 = vsel %vm351, %v98, %v132
    %v354 = vsel %vm46, %v352, %v165
    %v355 = vsel %vm46, %v353, %v166
    %vm356 = vcmask 1042432
    %v357 = vsel %vm356, %v354, %v200
    %v358 = vsel %vm356, %v355, %v201
    %vm359 = vcmask 1043456
    %v360 = vsel %vm359, %v357, %v235
    %v361 = vsel %vm359, %v358, %v236
    %vm362 = vcmask 1044480
    %v363 = vsel %vm362, %v360, %v270
    %v364 = vsel %vm362, %v361, %v271
    %vm365 = vcmask 1045504
    %v366 = vsel %vm365, %v363, %v305
    %v367 = vsel %vm365, %v364, %v306
    %vm368 = vcmask 1046528
    %v369 = vsel %vm368, %v366, %v340
    %v370 = vsel %vm368, %v367, %v341
    %v371 = vpack.c.bf16 %v370, %v369
    %v372 = vld [vmem:[%s5] sm:$0xf]
    %v373 = vld [vmem:[%s5 + $0x4] sm:$0xf]
    %v374 = vld [vmem:[%s6] sm:$0x1]
    %v376 = vperm.slane %v374, 0
    %v380 = vunpack.c.l.b16 %v372
    %v381 = vunpack.c.l.b16 %v373
    %v382 = vpack.c.b16 %v381, %v380
    %v385 = vsel %vm74, %v371, 0
    %387 = vmatpush.bf16.msra.mxu0 0
    %388 = vmatpush.bf16.msra.mxu0 0
    %389 = vmatpush.bf16.msra.mxu0 0
    %390 = vmatpush.bf16.msra.mxu0 0
    %391 = vmatpush.bf16.msra.mxu0 0
    %392 = vmatpush.bf16.msra.mxu0 0
    %393 = vmatpush.bf16.msra.mxu0 0
    %394 = vmatpush.bf16.msra.mxu0 %v382
    %395 = vmatmul.bf16.gmra.mxu0 %v385
    %v396 = vpop.f32.mrf.mxu0
    %v397 = vadd.f32 %v376, %v396
    %v398 = vpop.f32.mrf.mxu0
    %v399 = vadd.f32 %v376, %v398
    %400 = vdwg.mxu0
    %vm401 = vcmask 23552
    %v402 = vsel %vm401, %v397, -inf
    %403 = vmax.xlane.f32.xlu0 %v402
    %v404 = vpop.xlane.xlu0 %403
    %v405 = vsel %vm401, %v399, -inf
    %406 = vmax.xlane.f32.xlu0 %v405
    %v407 = vpop.xlane.xlu0 %406
    %v408 = vsub.f32 %v397, %v404
    %v409 = vsub.f32 %v399, %v407
    %v410 = vmul.f32 %v408, 1.442695
    %v411 = vpow.pop %v410
    %v412 = vmul.f32 %v409, 1.442695
    %v413 = vpow.pop %v412
    %v414 = vsel %vm401, %v411, 0.0
    %415 = vadd.xlane.f32.xlu0 %v414
    %v416 = vpop.xlane.xlu0 %415
    %v417 = vsel %vm401, %v413, 0.0
    %418 = vadd.xlane.f32.xlu0 %v417
    %v419 = vpop.xlane.xlu0 %418
    %v420 = vrcp.pop %v416
    %v421 = vmul.f32 %v416, %v420
    %v422 = vsub.f32 1.0, %v421
    %v423 = vmul.f32 %v420, %v422
    %v424 = vadd.f32 %v420, %v423
    %vm425 = vweird.f32 %v416
    %vm426 = vweird.f32 %v420
    %vm427 = vmor %vm425, %vm426
    %v428 = vsel %vm427, %v420, %v424
    %v429 = vand.u32 2147483647, %v416
    %vm430 = vcmp.eq.f32.partialorder %v429, 8.507059e+37
    %v431 = vand.u32 %v416, 2147483648
    %v432 = vor.u32 1.1754944e-38, %v431
    %v433 = vsel %vm430, %v432, %v428
    %v434 = vrcp.pop %v419
    %v435 = vmul.f32 %v419, %v434
    %v436 = vsub.f32 1.0, %v435
    %v437 = vmul.f32 %v434, %v436
    %v438 = vadd.f32 %v434, %v437
    %vm439 = vweird.f32 %v419
    %vm440 = vweird.f32 %v434
    %vm441 = vmor %vm439, %vm440
    %v442 = vsel %vm441, %v434, %v438
    %v443 = vand.u32 2147483647, %v419
    %vm444 = vcmp.eq.f32.partialorder %v443, 8.507059e+37
    %v445 = vand.u32 %v419, 2147483648
    %v446 = vor.u32 1.1754944e-38, %v445
    %v447 = vsel %vm444, %v446, %v442
    %v448 = vmul.f32 %v411, %v433
    %v449 = vmul.f32 %v413, %v447
    %vm450 = vcmask 48152
    %v451 = vsel %vm450, %v397, -inf
    %452 = vmax.xlane.f32.xlu0 %v451
    %v453 = vpop.xlane.xlu0 %452
    %v454 = vsel %vm450, %v399, -inf
    %455 = vmax.xlane.f32.xlu0 %v454
    %v456 = vpop.xlane.xlu0 %455
    %v457 = vsub.f32 %v397, %v453
    %v458 = vsub.f32 %v399, %v456
    %v459 = vmul.f32 %v457, 1.442695
    %v460 = vpow.pop %v459
    %v461 = vmul.f32 %v458, 1.442695
    %v462 = vpow.pop %v461
    %465 = vrot.lane.b32.xlu0 %v460, 125
    %v466 = vpop.permute.xlu0 %465
    %467 = vrot.lane.b32.xlu0 %v462, 125
    %v468 = vpop.permute.xlu0 %467
    %v471 = vsel %vm401, %v466, 0.0
    %472 = vadd.xlane.f32.xlu0 %v471
    %v473 = vpop.xlane.xlu0 %472
    %v474 = vsel %vm401, %v468, 0.0
    %475 = vadd.xlane.f32.xlu0 %v474
    %v476 = vpop.xlane.xlu0 %475
    %v477 = vrcp.pop %v473
    %v478 = vmul.f32 %v473, %v477
    %v479 = vsub.f32 1.0, %v478
    %v480 = vmul.f32 %v477, %v479
    %v481 = vadd.f32 %v477, %v480
    %vm482 = vweird.f32 %v473
    %vm483 = vweird.f32 %v477
    %vm484 = vmor %vm482, %vm483
    %v485 = vsel %vm484, %v477, %v481
    %v486 = vand.u32 2147483647, %v473
    %vm487 = vcmp.eq.f32.partialorder %v486, 8.507059e+37
    %v488 = vand.u32 %v473, 2147483648
    %v489 = vor.u32 1.1754944e-38, %v488
    %v490 = vsel %vm487, %v489, %v485
    %v491 = vrcp.pop %v476
    %v492 = vmul.f32 %v476, %v491
    %v493 = vsub.f32 1.0, %v492
    %v494 = vmul.f32 %v491, %v493
    %v495 = vadd.f32 %v491, %v494
    %vm496 = vweird.f32 %v476
    %vm497 = vweird.f32 %v491
    %vm498 = vmor %vm496, %vm497
    %v499 = vsel %vm498, %v491, %v495
    %v500 = vand.u32 2147483647, %v476
    %vm501 = vcmp.eq.f32.partialorder %v500, 8.507059e+37
    %v502 = vand.u32 %v476, 2147483648
    %v503 = vor.u32 1.1754944e-38, %v502
    %v504 = vsel %vm501, %v503, %v499
    %v505 = vmul.f32 %v460, %v490
    %v506 = vmul.f32 %v462, %v504
    %v507 = vsel %vm401, %v448, %v505
    %v508 = vsel %vm401, %v449, %v506
    %vm509 = vcmask 48128
    %510 = vst.msk [vmem:[%s7] sm:$0xff] %vm509, %v507
    %511 = vst.msk [vmem:[%s7 + $0x8] sm:$0xff] %vm509, %v508
    // Predicated region
    $region30: #{tpu_custom_call.1} parent=1 // pred_check
      _
    $region31: #{tpu_custom_call.1} parent=1 // pred_check_branch
      %513 = sbr.rel (0) target = $region33
    $region32: #{tpu_custom_call.1} parent=1 // pred_region
      _
    $region33: #{tpu_custom_call.1} parent=1 // pred_fallthru
      _
    // Predicated region
    $region34: #{tpu_custom_call.1} parent=1 // pred_check
      _
    $region35: #{tpu_custom_call.1} parent=1 // pred_check_branch
      %515 = sbr.rel (0) target = $region37
    $region36: #{tpu_custom_call.1} parent=1 // pred_region
      %517 = vsyncadd [#allocation3], 0
      %s519 = sshll.u32 [#allocation2], 4
      %s520 = int_to_ptr.vmem [resolvable:$true] %s519
      %s521 = sshll.u32 %s8, 4
      %s522 = int_to_ptr.hbm [resolvable:$true] %s521
      %524 = dma.vmem_to_hbm [thread:$0]  %s520, 32, %s522, [#allocation3]
    $region37: #{tpu_custom_call.1} parent=1 // pred_fallthru
      _
    // Predicated region
    $region38: #{tpu_custom_call.1} parent=1 // pred_check
      _
    $region39: #{tpu_custom_call.1} parent=1 // pred_check_branch
      %526 = sbr.rel (0) target = $region41
    $region40: #{tpu_custom_call.1} parent=1 // pred_region
      _
    $region41: #{tpu_custom_call.1} parent=1 // pred_fallthru
      _
    // Predicated region
    $region42: #{tpu_custom_call.1} parent=1 // pred_check
      _
    $region43: #{tpu_custom_call.1} parent=1 // pred_check_branch
      %528 = sbr.rel (0) target = $region45
    $region44: #{tpu_custom_call.1} parent=1 // pred_region
      %530 = dma.done [#allocation3], 32
    $region45: #{tpu_custom_call.1} parent=1 // pred_fallthru
      _
    %531 = vsyncpa [#allocation3], 1

</llo_original>
